<compile_context>
chip_gen: v6e
topology: v6e:2x2x1
jax: 0.10.0
libtpu: 0.0.40
codegen_flags: <defaults>
</compile_context>

<pallas_src>
import jax
import jax.numpy as jnp
from jax.experimental import pallas as pl
from jax.experimental.pallas import tpu as pltpu

LAYER_SIZES = [2, 128, 128, 128, 2]
NEG_SLOPE = 0.01  # nn.LeakyReLU default


def _round_up(n, m):
    return ((n + m - 1) // m) * m


def _leaky(h):
    # 2-op LeakyReLU (mul + max); identical to where(h > 0, h, a*h) for 0 < a < 1.
    return jnp.maximum(h, NEG_SLOPE * h)


def mlp_kernel(x_ref, w0_ref, b0_ref, w1_ref, b1_ref, w2_ref, b2_ref,
               w3_ref, b3_ref, o_ref):
    """Transposed layout: x (d_in, T); weights PyTorch (out, in); out (d_out, T).

    Dtypes are carried by the refs:
      mm  = w1_ref.dtype -> MXU operand dtype (bf16 fast path / f32 exact path)
      act = b1_ref.dtype -> elementwise dtype for hidden bias + activation
                            (bf16 on v6e/v7x, f32 on v5e and on the exact path)
    """
    mm = w1_ref.dtype
    act = b1_ref.dtype

    x = x_ref[...]                                    # (d_in, T) f32, lane-dense

    # Layer 0 on the VPU: contraction depth d_in (=2) would waste the MXU.
    # goal is already folded into b0_ref (= b0 - W0 @ goal) by the wrapper.
    h = b0_ref[...]                                   # (H, 1) f32
    for k in range(x_ref.shape[0]):                   # static, tiny (d_in = 2)
        h = h + w0_ref[:, k:k + 1] * x[k:k + 1, :]    # (H,1)*(1,T) -> (H,T)
    h = _leaky(h).astype(mm)                          # single cast feeding the MXU

    # Hidden layers: MXU matmul -> bias -> LeakyReLU in `act` dtype. On v6e/v7x
    # act == mm == bf16, halving VALU work and VMEM traffic and removing the
    # standalone astype passes (astype to the same dtype is a no-op).
    h = jnp.dot(w1_ref[...], h, preferred_element_type=act) + b1_ref[...]
    h = _leaky(h).astype(mm)
    h = jnp.dot(w2_ref[...], h, preferred_element_type=act) + b2_ref[...]
    h = _leaky(h).astype(mm)

    # Output layer: f32 accumulate + f32 store.
    out = jnp.dot(w3_ref[...], h, preferred_element_type=jnp.float32) + b3_ref[...]
    o_ref[...] = out.astype(o_ref.dtype)


def _bf16_valu_supported():
    """v6e / v7x have bf16-native VALUs; v5e and earlier do not."""
    try:
        kind = jax.devices()[0].device_kind.lower()
    except Exception:
        return False
    return any(tag in kind for tag in ("v6", "v7", "7x"))


def _choose_tiling(B, batch_tile):
    """Pick a lane-aligned batch tile T and padded batch Bp (multiples of 128).

    Goals (perf review): pad to the 128-lane granule, not to a huge tile; keep
    tiles large to amortize ~0.35 us/grid-step; use >= 2 tiles whenever the
    batch spans >= 2 granules so both v7x TensorCores get work.
    """
    lanes = _round_up(max(int(B), 1), 128) // 128          # 128-column granules
    max_tile_lanes = max(1, min(lanes, max(1, int(batch_tile) // 128)))
    g_min = -(-lanes // max_tile_lanes)                     # ceil-div: min #tiles
    if lanes >= 2:
        g_min = max(g_min, 2)                               # v7x megacore
    best_key, best = None, None
    for g in range(g_min, min(lanes, g_min + 8) + 1):
        tile_lanes = -(-lanes // g)
        pad_lanes = g * tile_lanes - lanes                  # dead 128-col granules
        key = (pad_lanes, g % 2, g)                         # least pad, prefer even, fewest steps
        if best_key is None or key < best_key:
            best_key, best = key, (tile_lanes, g)
    tile_lanes, g = best
    return tile_lanes * 128, g * tile_lanes * 128           # (T, Bp)


def normal_nn_forward(x, goal, params, *, batch_tile=8192, use_bf16=True,
                      bf16_elementwise=None):
    """Forward pass of NormalNN: out = MLP(x - goal).

    x:      (B, d_in) float32
    goal:   (d_in,) or (1, d_in) float32
    params: list of (W, b) in PyTorch nn.Linear layout: W (out, in), b (out,)

    use_bf16:         bf16 MXU operands with f32-or-bf16 elementwise (production
                      path). use_bf16=False is the exact-f32 validation path
                      (multi-pass-emulated on the MXU; slower, esp. on v5e).
    bf16_elementwise: do hidden bias + LeakyReLU in bf16. None = auto (on for
                      v6e/v7x, off for v5e whose VPU has no bf16 ALU).
    """
    x = jnp.asarray(x, jnp.float32)
    B, d_in = x.shape
    (w0, b0), (w1, b1), (w2, b2), (w3, b3) = params
    H = w0.shape[0]
    d_out = w3.shape[0]

    if bf16_elementwise is None:
        bf16_elementwise = bool(use_bf16) and _bf16_valu_supported()
    mm_dtype = jnp.bfloat16 if use_bf16 else jnp.float32
    act_dtype = jnp.bfloat16 if (use_bf16 and bf16_elementwise) else jnp.float32

    # --- parameter prep (wrapper-side, cheap) -------------------------------
    goal_col = jnp.reshape(jnp.asarray(goal, jnp.float32), (d_in, 1))
    # Fold goal into the first-layer bias: W0 (x - g) + b0 == W0 x + (b0 - W0 g)
    b0_eff = (jnp.reshape(b0, (H, 1)).astype(jnp.float32)
              - w0.astype(jnp.float32) @ goal_col)                    # (H, 1) f32
    b1c = jnp.reshape(b1, (H, 1)).astype(act_dtype)
    b2c = jnp.reshape(b2, (H, 1)).astype(act_dtype)
    b3c = jnp.reshape(b3, (d_out, 1)).astype(jnp.float32)

    w0f = w0.astype(jnp.float32)          # first layer stays f32 on the VPU
    w1m = w1.astype(mm_dtype)
    w2m = w2.astype(mm_dtype)
    w3m = w3.astype(mm_dtype)

    # --- lane-dense tiling: batch rides the lane (last) axis ----------------
    T, Bp = _choose_tiling(B, batch_tile)
    x_t = jnp.pad(x, ((0, Bp - B), (0, 0))).T            # (d_in, Bp), zero-padded cols

    def const_spec(shape):
        # Weights/biases: constant block index -> DMA'd once, VMEM-resident.
        return pl.BlockSpec(shape, lambda i: (0, 0))

    flops = 2 * Bp * (d_in * H + 2 * H * H + H * d_out)
    param_bytes = sum(int(a.size) * a.dtype.itemsize
                      for a in (w0f, b0_eff, w1m, b1c, w2m, b2c, w3m, b3c))
    bytes_accessed = int(x_t.size) * 4 + Bp * d_out * 4 + param_bytes

    out_t = pl.pallas_call(
        mlp_kernel,
        out_shape=jax.ShapeDtypeStruct((d_out, Bp), jnp.float32),
        grid=(Bp // T,),
        in_specs=[
            pl.BlockSpec((d_in, T), lambda i: (0, i)),        # x tile (lane-dense)
            const_spec((H, d_in)),  const_spec((H, 1)),       # W0, b0_eff
            const_spec((H, H)),     const_spec((H, 1)),       # W1, b1
            const_spec((H, H)),     const_spec((H, 1)),       # W2, b2
            const_spec((d_out, H)), const_spec((d_out, 1)),   # W3, b3
        ],
        out_specs=pl.BlockSpec((d_out, T), lambda i: (0, i)),
        compiler_params=pltpu.CompilerParams(
            dimension_semantics=("parallel",),    # shard batch tiles across TCs
            vmem_limit_bytes=32 * 1024 * 1024,    # T<=8192 fits on v5e/v6e/v7x
        ),
        cost_estimate=pl.CostEstimate(
            flops=flops, transcendentals=0, bytes_accessed=bytes_accessed),
    )(x_t, w0f, b0_eff, w1m, b1c, w2m, b2c, w3m, b3c)

    return out_t[:, :B].T                                  # (B, d_out)


# ------------------------- init + pure-JAX reference -------------------------

def init_params(key, layer_sizes):
    """PyTorch-layout params: W (out, in) xavier_uniform, b (out,) zeros."""
    params = []
    for i in range(len(layer_sizes) - 1):
        key, sub = jax.random.split(key)
        fan_in, fan_out = layer_sizes[i], layer_sizes[i + 1]
        limit = (6.0 / (fan_in + fan_out)) ** 0.5
        w = jax.random.uniform(sub, (fan_out, fan_in), jnp.float32,
                               minval=-limit, maxval=limit)
        b = jnp.zeros((fan_out,), jnp.float32)
        params.append((w, b))
    return params


def reference_forward(x, goal, params):
    h = x - jnp.reshape(goal, (1, -1))
    for i, (w, b) in enumerate(params):
        h = h @ w.T + b
        if i < len(params) - 1:
            h = jnp.where(h > 0, h, NEG_SLOPE * h)
    return h


if __name__ == "__main__":
    key = jax.random.PRNGKey(0)
    k_x, k_g, k_p, k_x2 = jax.random.split(key, 4)

    params = init_params(k_p, LAYER_SIZES)
    goal = jax.random.normal(k_g, (LAYER_SIZES[0],), jnp.float32)

    # Small batch (single tile).
    batch = 8
    x = jax.random.normal(k_x, (batch, LAYER_SIZES[0]), jnp.float32)
    ref = reference_forward(x, goal, params)

    # Exact-semantics path (f32 matmuls, f32 elementwise) — tight tolerance.
    out_f32 = jax.block_until_ready(
        normal_nn_forward(x, goal, params, use_bf16=False))
    assert out_f32.shape == (batch, LAYER_SIZES[-1])
    assert jnp.allclose(out_f32, ref, atol=2e-5, rtol=2e-5), "f32 path mismatch"

    # Production path (bf16 MXU operands; elementwise dtype auto-picked per chip).
    out_bf16 = jax.block_until_ready(
        normal_nn_forward(x, goal, params, use_bf16=True))
    assert out_bf16.shape == (batch, LAYER_SIZES[-1])
    assert jnp.allclose(out_bf16, ref, atol=5e-2, rtol=5e-2), "bf16 path mismatch"

    # Medium batch: multi-tile grid, 128-granule padding sliced off, and the
    # bf16-elementwise kernel path forced on so it is exercised on every chip.
    batch2 = 260
    x2 = jax.random.normal(k_x2, (batch2, LAYER_SIZES[0]), jnp.float32)
    ref2 = reference_forward(x2, goal, params)
    out2 = jax.block_until_ready(
        normal_nn_forward(x2, goal, params, use_bf16=True, bf16_elementwise=True))
    assert out2.shape == (batch2, LAYER_SIZES[-1])
    assert jnp.allclose(out2, ref2, atol=5e-2, rtol=5e-2), "multi-tile bf16 mismatch"

    print("KERNEL_OK")
</pallas_src>

<mosaic_0001>
module attributes {stable_mosaic.version = 11 : i64} {
  func.func @mlp_kernel(%arg0: i32, %arg1: memref<2x128xf32, #tpu.memory_space<vmem>>, %arg2: memref<128x2xf32, #tpu.memory_space<vmem>>, %arg3: memref<128x1xf32, #tpu.memory_space<vmem>>, %arg4: memref<128x128xf32, #tpu.memory_space<vmem>>, %arg5: memref<128x1xf32, #tpu.memory_space<vmem>>, %arg6: memref<128x128xf32, #tpu.memory_space<vmem>>, %arg7: memref<128x1xf32, #tpu.memory_space<vmem>>, %arg8: memref<2x128xf32, #tpu.memory_space<vmem>>, %arg9: memref<2x1xf32, #tpu.memory_space<vmem>>, %arg10: memref<2x128xf32, #tpu.memory_space<vmem>>) attributes {dimension_semantics = [#tpu.dimension_semantics<parallel>], iteration_bounds = array<i64: 1>, scalar_prefetch = 0 : i64, scratch_operands = 0 : i64, tpu.core_type = #tpu.core_type<tc>, window_params = [{transform_indices = @transform_0, window_bounds = array<i64: 2, 128>}, {pipeline_mode = #tpu.pipeline_mode<synchronous>, transform_indices = @transform_1, window_bounds = array<i64: 128, 2>}, {pipeline_mode = #tpu.pipeline_mode<synchronous>, transform_indices = @transform_2, window_bounds = array<i64: 128, 1>}, {pipeline_mode = #tpu.pipeline_mode<synchronous>, transform_indices = @transform_3, window_bounds = array<i64: 128, 128>}, {pipeline_mode = #tpu.pipeline_mode<synchronous>, transform_indices = @transform_4, window_bounds = array<i64: 128, 1>}, {pipeline_mode = #tpu.pipeline_mode<synchronous>, transform_indices = @transform_5, window_bounds = array<i64: 128, 128>}, {pipeline_mode = #tpu.pipeline_mode<synchronous>, transform_indices = @transform_6, window_bounds = array<i64: 128, 1>}, {pipeline_mode = #tpu.pipeline_mode<synchronous>, transform_indices = @transform_7, window_bounds = array<i64: 2, 128>}, {pipeline_mode = #tpu.pipeline_mode<synchronous>, transform_indices = @transform_8, window_bounds = array<i64: 2, 1>}, {transform_indices = @transform_9, window_bounds = array<i64: 2, 128>}]} {
    %c0 = arith.constant 0 : index
    %c0_0 = arith.constant 0 : index
    %0 = vector.load %arg1[%c0, %c0_0] : memref<2x128xf32, #tpu.memory_space<vmem>>, vector<2x128xf32>
    %c0_1 = arith.constant 0 : index
    %c0_2 = arith.constant 0 : index
    %1 = vector.load %arg3[%c0_1, %c0_2] : memref<128x1xf32, #tpu.memory_space<vmem>>, vector<128x1xf32>
    %c0_3 = arith.constant 0 : index
    %c0_4 = arith.constant 0 : index
    %2 = vector.load %arg2[%c0_3, %c0_4] : memref<128x2xf32, #tpu.memory_space<vmem>>, vector<128x1xf32>
    %3 = vector.extract_strided_slice %0 {offsets = [0, 0], sizes = [1, 128], strides = [1, 1]} : vector<2x128xf32> to vector<1x128xf32>
    %4 = vector.broadcast %2 : vector<128x1xf32> to vector<128x128xf32>
    %5 = vector.broadcast %3 : vector<1x128xf32> to vector<128x128xf32>
    %6 = arith.mulf %4, %5 : vector<128x128xf32>
    %7 = vector.broadcast %1 : vector<128x1xf32> to vector<128x128xf32>
    %8 = arith.addf %7, %6 : vector<128x128xf32>
    %c0_5 = arith.constant 0 : index
    %c1 = arith.constant 1 : index
    %9 = vector.load %arg2[%c0_5, %c1] : memref<128x2xf32, #tpu.memory_space<vmem>>, vector<128x1xf32>
    %10 = vector.extract_strided_slice %0 {offsets = [1, 0], sizes = [1, 128], strides = [1, 1]} : vector<2x128xf32> to vector<1x128xf32>
    %11 = vector.broadcast %9 : vector<128x1xf32> to vector<128x128xf32>
    %12 = vector.broadcast %10 : vector<1x128xf32> to vector<128x128xf32>
    %13 = arith.mulf %11, %12 : vector<128x128xf32>
    %14 = arith.addf %8, %13 : vector<128x128xf32>
    %cst = arith.constant 0.00999999977 : f32
    %15 = vector.broadcast %cst : f32 to vector<128x128xf32>
    %16 = arith.mulf %15, %14 : vector<128x128xf32>
    %17 = arith.maximumf %14, %16 : vector<128x128xf32>
    %c0_6 = arith.constant 0 : index
    %c0_7 = arith.constant 0 : index
    %18 = vector.load %arg4[%c0_6, %c0_7] : memref<128x128xf32, #tpu.memory_space<vmem>>, vector<128x128xf32>
    %cst_8 = arith.constant dense<0.000000e+00> : vector<128x128xf32>
    %19 = tpu.matmul %18, %17, %cst_8 {dimension_numbers = #tpu.dot_dimension_numbers<[1], [0], [0], [1], [0, 0, 1, 1], [], []>} : vector<128x128xf32>, vector<128x128xf32>, vector<128x128xf32> -> vector<128x128xf32>
    %c0_9 = arith.constant 0 : index
    %c0_10 = arith.constant 0 : index
    %20 = vector.load %arg5[%c0_9, %c0_10] : memref<128x1xf32, #tpu.memory_space<vmem>>, vector<128x1xf32>
    %21 = vector.broadcast %20 : vector<128x1xf32> to vector<128x128xf32>
    %22 = arith.addf %19, %21 : vector<128x128xf32>
    %cst_11 = arith.constant 0.00999999977 : f32
    %23 = vector.broadcast %cst_11 : f32 to vector<128x128xf32>
    %24 = arith.mulf %23, %22 : vector<128x128xf32>
    %25 = arith.maximumf %22, %24 : vector<128x128xf32>
    %c0_12 = arith.constant 0 : index
    %c0_13 = arith.constant 0 : index
    %26 = vector.load %arg6[%c0_12, %c0_13] : memref<128x128xf32, #tpu.memory_space<vmem>>, vector<128x128xf32>
    %cst_14 = arith.constant dense<0.000000e+00> : vector<128x128xf32>
    %27 = tpu.matmul %26, %25, %cst_14 {dimension_numbers = #tpu.dot_dimension_numbers<[1], [0], [0], [1], [0, 0, 1, 1], [], []>} : vector<128x128xf32>, vector<128x128xf32>, vector<128x128xf32> -> vector<128x128xf32>
    %c0_15 = arith.constant 0 : index
    %c0_16 = arith.constant 0 : index
    %28 = vector.load %arg7[%c0_15, %c0_16] : memref<128x1xf32, #tpu.memory_space<vmem>>, vector<128x1xf32>
    %29 = vector.broadcast %28 : vector<128x1xf32> to vector<128x128xf32>
    %30 = arith.addf %27, %29 : vector<128x128xf32>
    %cst_17 = arith.constant 0.00999999977 : f32
    %31 = vector.broadcast %cst_17 : f32 to vector<128x128xf32>
    %32 = arith.mulf %31, %30 : vector<128x128xf32>
    %33 = arith.maximumf %30, %32 : vector<128x128xf32>
    %c0_18 = arith.constant 0 : index
    %c0_19 = arith.constant 0 : index
    %34 = vector.load %arg8[%c0_18, %c0_19] : memref<2x128xf32, #tpu.memory_space<vmem>>, vector<2x128xf32>
    %cst_20 = arith.constant dense<0.000000e+00> : vector<2x128xf32>
    %35 = tpu.matmul %34, %33, %cst_20 {dimension_numbers = #tpu.dot_dimension_numbers<[1], [0], [0], [1], [0, 0, 1, 1], [], []>} : vector<2x128xf32>, vector<128x128xf32>, vector<2x128xf32> -> vector<2x128xf32>
    %c0_21 = arith.constant 0 : index
    %c0_22 = arith.constant 0 : index
    %36 = vector.load %arg9[%c0_21, %c0_22] : memref<2x1xf32, #tpu.memory_space<vmem>>, vector<2x1xf32>
    %37 = vector.broadcast %36 : vector<2x1xf32> to vector<2x128xf32>
    %38 = arith.addf %35, %37 : vector<2x128xf32>
    %c0_23 = arith.constant 0 : index
    %c0_24 = arith.constant 0 : index
    %39 = vector.load %arg10[%c0_23, %c0_24] : memref<2x128xf32, #tpu.memory_space<vmem>>, vector<2x128xf32>
    tpu.vector_store %arg10[%c0_23, %c0_24], %38 {strides = array<i32>} : memref<2x128xf32, #tpu.memory_space<vmem>>, vector<2x128xf32>,
    return
  }
  func.func @transform_0(%arg0: i32) -> (i32, i32) {
    %c0_i32 = arith.constant 0 : i32
    %c0_i32_0 = arith.constant 0 : i32
    return %c0_i32, %arg0 : i32, i32
  }
  func.func @transform_1(%arg0: i32) -> (i32, i32) {
    %c0_i32 = arith.constant 0 : i32
    %c0_i32_0 = arith.constant 0 : i32
    %c0_i32_1 = arith.constant 0 : i32
    return %c0_i32, %c0_i32_0 : i32, i32
  }
  func.func @transform_2(%arg0: i32) -> (i32, i32) {
    %c0_i32 = arith.constant 0 : i32
    %c0_i32_0 = arith.constant 0 : i32
    %c0_i32_1 = arith.constant 0 : i32
    return %c0_i32, %c0_i32_0 : i32, i32
  }
  func.func @transform_3(%arg0: i32) -> (i32, i32) {
    %c0_i32 = arith.constant 0 : i32
    %c0_i32_0 = arith.constant 0 : i32
    %c0_i32_1 = arith.constant 0 : i32
    return %c0_i32, %c0_i32_0 : i32, i32
  }
  func.func @transform_4(%arg0: i32) -> (i32, i32) {
    %c0_i32 = arith.constant 0 : i32
    %c0_i32_0 = arith.constant 0 : i32
    %c0_i32_1 = arith.constant 0 : i32
    return %c0_i32, %c0_i32_0 : i32, i32
  }
  func.func @transform_5(%arg0: i32) -> (i32, i32) {
    %c0_i32 = arith.constant 0 : i32
    %c0_i32_0 = arith.constant 0 : i32
    %c0_i32_1 = arith.constant 0 : i32
    return %c0_i32, %c0_i32_0 : i32, i32
  }
  func.func @transform_6(%arg0: i32) -> (i32, i32) {
    %c0_i32 = arith.constant 0 : i32
    %c0_i32_0 = arith.constant 0 : i32
    %c0_i32_1 = arith.constant 0 : i32
    return %c0_i32, %c0_i32_0 : i32, i32
  }
  func.func @transform_7(%arg0: i32) -> (i32, i32) {
    %c0_i32 = arith.constant 0 : i32
    %c0_i32_0 = arith.constant 0 : i32
    %c0_i32_1 = arith.constant 0 : i32
    return %c0_i32, %c0_i32_0 : i32, i32
  }
  func.func @transform_8(%arg0: i32) -> (i32, i32) {
    %c0_i32 = arith.constant 0 : i32
    %c0_i32_0 = arith.constant 0 : i32
    %c0_i32_1 = arith.constant 0 : i32
    return %c0_i32, %c0_i32_0 : i32, i32
  }
  func.func @transform_9(%arg0: i32) -> (i32, i32) {
    %c0_i32 = arith.constant 0 : i32
    %c0_i32_0 = arith.constant 0 : i32
    return %c0_i32, %arg0 : i32, i32
  }
}

</mosaic_0001>

<llo_original>
// kernel: tpu_custom_call.1
$region0: #{tpu_custom_call.1}
  #allocation0 [shape = 'u32[]', space=smem, size = 0x4, offset = 0x4, fixed_abs, tag = 'smem constant byte address 0x4 - core index']
  #allocation1 [shape = 'u32[144,128]{1,0:T(1,128)}', space=vmem, size = 0x12000, scoped, tag = 'internal scratch']
  %s0 = inlined_call_operand.vmem [shape: f32[2,128], index: 0, kind: input, shape index: {}]
  %s1 = inlined_call_operand.vmem [shape: f32[128,2], index: 1, kind: input, shape index: {}]
  %s2 = inlined_call_operand.vmem [shape: f32[128,1], index: 2, kind: input, shape index: {}]
  %s3 = inlined_call_operand.vmem [shape: f32[128,128], index: 3, kind: input, shape index: {}]
  %s4 = inlined_call_operand.vmem [shape: f32[128,1], index: 4, kind: input, shape index: {}]
  %s5 = inlined_call_operand.vmem [shape: f32[128,128], index: 5, kind: input, shape index: {}]
  %s6 = inlined_call_operand.vmem [shape: f32[128,1], index: 6, kind: input, shape index: {}]
  %s7 = inlined_call_operand.vmem [shape: f32[2,128], index: 7, kind: input, shape index: {}]
  %s8 = inlined_call_operand.vmem [shape: f32[2,1], index: 8, kind: input, shape index: {}]
  %s9 = inlined_call_operand.hbm [shape: f32[2,128], index: 9, kind: output, shape index: {}]
  %s10 = sld [smem:[#allocation0]]
  $region46: #{tpu_custom_call.1} parent=0
    _
  %s12 = ssub.s32 1, %s10
  %s13 = scalar_select 0, %s12, %s10
  $region1: #{tpu_custom_call.1} parent=0
    #allocation2 [shape = 'u8[1024]{0}', space=vmem, size = 0x400, scoped, tag = 'output window, operand 0, single buffered']
    #allocation3 [shape = 's32[1]{0}', space=sflag, size = 0x4, scoped, tag = 'scoped memory for tpu_custom_call.1']
    %14 = vsyncpa [#allocation3], 0
    // Predicated region
    $region2: #{tpu_custom_call.1} parent=1 // pred_check
      _
    $region3: #{tpu_custom_call.1} parent=1 // pred_check_branch
      %16 = sbr.rel (0) target = $region5
    $region4: #{tpu_custom_call.1} parent=1 // pred_region
      _
    $region5: #{tpu_custom_call.1} parent=1 // pred_fallthru
      _
    // Predicated region
    $region6: #{tpu_custom_call.1} parent=1 // pred_check
      _
    $region7: #{tpu_custom_call.1} parent=1 // pred_check_branch
      %18 = sbr.rel (0) target = $region9
    $region8: #{tpu_custom_call.1} parent=1 // pred_region
      _
    $region9: #{tpu_custom_call.1} parent=1 // pred_fallthru
      _
    // Predicated region
    $region10: #{tpu_custom_call.1} parent=1 // pred_check
      _
    $region11: #{tpu_custom_call.1} parent=1 // pred_check_branch
      %20 = sbr.rel (0) target = $region13
    $region12: #{tpu_custom_call.1} parent=1 // pred_region
      _
    $region13: #{tpu_custom_call.1} parent=1 // pred_fallthru
      _
    // Predicated region
    $region14: #{tpu_custom_call.1} parent=1 // pred_check
      _
    $region15: #{tpu_custom_call.1} parent=1 // pred_check_branch
      %22 = sbr.rel (0) target = $region17
    $region16: #{tpu_custom_call.1} parent=1 // pred_region
      _
    $region17: #{tpu_custom_call.1} parent=1 // pred_fallthru
      _
    // Predicated region
    $region18: #{tpu_custom_call.1} parent=1 // pred_check
      _
    $region19: #{tpu_custom_call.1} parent=1 // pred_check_branch
      %24 = sbr.rel (0) target = $region21
    $region20: #{tpu_custom_call.1} parent=1 // pred_region
      _
    $region21: #{tpu_custom_call.1} parent=1 // pred_fallthru
      _
    // Predicated region
    $region22: #{tpu_custom_call.1} parent=1 // pred_check
      _
    $region23: #{tpu_custom_call.1} parent=1 // pred_check_branch
      %26 = sbr.rel (0) target = $region25
    $region24: #{tpu_custom_call.1} parent=1 // pred_region
      _
    $region25: #{tpu_custom_call.1} parent=1 // pred_fallthru
      _
    // Predicated region
    $region26: #{tpu_custom_call.1} parent=1 // pred_check
      _
    $region27: #{tpu_custom_call.1} parent=1 // pred_check_branch
      %28 = sbr.rel (0) target = $region29
    $region28: #{tpu_custom_call.1} parent=1 // pred_region
      _
    $region29: #{tpu_custom_call.1} parent=1 // pred_fallthru
      _
    // Predicated region
    $region30: #{tpu_custom_call.1} parent=1 // pred_check
      _
    $region31: #{tpu_custom_call.1} parent=1 // pred_check_branch
      %30 = sbr.rel (0) target = $region33
    $region32: #{tpu_custom_call.1} parent=1 // pred_region
      _
    $region33: #{tpu_custom_call.1} parent=1 // pred_fallthru
      _
    // Predicated region
    $region34: #{tpu_custom_call.1} parent=1 // pred_check
      _
    $region35: #{tpu_custom_call.1} parent=1 // pred_check_branch
      %32 = sbr.rel (0) target = $region37
    $region36: #{tpu_custom_call.1} parent=1 // pred_region
      _
    $region37: #{tpu_custom_call.1} parent=1 // pred_fallthru
      _
    %v33 = vld [vmem:[%s0] sm:$0x3]
    %v34 = vld [vmem:[%s2] sm:$0xff]
    %v35 = vld [vmem:[%s2 + $0x8] sm:$0xff]
    %v36 = vld [vmem:[%s2 + $0x10] sm:$0xff]
    %v37 = vld [vmem:[%s2 + $0x18] sm:$0xff]
    %v38 = vld [vmem:[%s2 + $0x20] sm:$0xff]
    %v39 = vld [vmem:[%s2 + $0x28] sm:$0xff]
    %v40 = vld [vmem:[%s2 + $0x30] sm:$0xff]
    %v41 = vld [vmem:[%s2 + $0x38] sm:$0xff]
    %v42 = vld [vmem:[%s2 + $0x40] sm:$0xff]
    %v43 = vld [vmem:[%s2 + $0x48] sm:$0xff]
    %v44 = vld [vmem:[%s2 + $0x50] sm:$0xff]
    %v45 = vld [vmem:[%s2 + $0x58] sm:$0xff]
    %v46 = vld [vmem:[%s2 + $0x60] sm:$0xff]
    %v47 = vld [vmem:[%s2 + $0x68] sm:$0xff]
    %v48 = vld [vmem:[%s2 + $0x70] sm:$0xff]
    %v49 = vld [vmem:[%s2 + $0x78] sm:$0xff]
    %v50 = vld [vmem:[%s1] sm:$0xff]
    %v51 = vld [vmem:[%s1 + $0x8] sm:$0xff]
    %v52 = vld [vmem:[%s1 + $0x10] sm:$0xff]
    %v53 = vld [vmem:[%s1 + $0x18] sm:$0xff]
    %v54 = vld [vmem:[%s1 + $0x20] sm:$0xff]
    %v55 = vld [vmem:[%s1 + $0x28] sm:$0xff]
    %v56 = vld [vmem:[%s1 + $0x30] sm:$0xff]
    %v57 = vld [vmem:[%s1 + $0x38] sm:$0xff]
    %v58 = vld [vmem:[%s1 + $0x40] sm:$0xff]
    %v59 = vld [vmem:[%s1 + $0x48] sm:$0xff]
    %v60 = vld [vmem:[%s1 + $0x50] sm:$0xff]
    %v61 = vld [vmem:[%s1 + $0x58] sm:$0xff]
    %v62 = vld [vmem:[%s1 + $0x60] sm:$0xff]
    %v63 = vld [vmem:[%s1 + $0x68] sm:$0xff]
    %v64 = vld [vmem:[%s1 + $0x70] sm:$0xff]
    %v65 = vld [vmem:[%s1 + $0x78] sm:$0xff]
    %67 = vset.pattern.permute.xlu0 0
    %68 = vperm.xlu0 %67, %v50
    %v69 = vpop.permute.xlu0 %68
    %72 = vset.pattern.permute.xlu0 0
    %73 = vperm.xlu0 %72, %v51
    %v74 = vpop.permute.xlu0 %73
    %77 = vset.pattern.permute.xlu0 0
    %78 = vperm.xlu0 %77, %v52
    %v79 = vpop.permute.xlu0 %78
    %82 = vset.pattern.permute.xlu0 0
    %83 = vperm.xlu0 %82, %v53
    %v84 = vpop.permute.xlu0 %83
    %87 = vset.pattern.permute.xlu0 0
    %88 = vperm.xlu0 %87, %v54
    %v89 = vpop.permute.xlu0 %88
    %92 = vset.pattern.permute.xlu0 0
    %93 = vperm.xlu0 %92, %v55
    %v94 = vpop.permute.xlu0 %93
    %97 = vset.pattern.permute.xlu0 0
    %98 = vperm.xlu0 %97, %v56
    %v99 = vpop.permute.xlu0 %98
    %102 = vset.pattern.permute.xlu0 0
    %103 = vperm.xlu0 %102, %v57
    %v104 = vpop.permute.xlu0 %103
    %107 = vset.pattern.permute.xlu0 0
    %108 = vperm.xlu0 %107, %v58
    %v109 = vpop.permute.xlu0 %108
    %112 = vset.pattern.permute.xlu0 0
    %113 = vperm.xlu0 %112, %v59
    %v114 = vpop.permute.xlu0 %113
    %117 = vset.pattern.permute.xlu0 0
    %118 = vperm.xlu0 %117, %v60
    %v119 = vpop.permute.xlu0 %118
    %122 = vset.pattern.permute.xlu0 0
    %123 = vperm.xlu0 %122, %v61
    %v124 = vpop.permute.xlu0 %123
    %127 = vset.pattern.permute.xlu0 0
    %128 = vperm.xlu0 %127, %v62
    %v129 = vpop.permute.xlu0 %128
    %132 = vset.pattern.permute.xlu0 0
    %133 = vperm.xlu0 %132, %v63
    %v134 = vpop.permute.xlu0 %133
    %137 = vset.pattern.permute.xlu0 0
    %138 = vperm.xlu0 %137, %v64
    %v139 = vpop.permute.xlu0 %138
    %142 = vset.pattern.permute.xlu0 0
    %143 = vperm.xlu0 %142, %v65
    %v144 = vpop.permute.xlu0 %143
    %v146 = vlaneseq
    %v147 = vshrl.u32 %v146, 7
    %v148 = vsub.s32 0, %v147
    %v149 = vrot.slane %v33, %v148
    %v150 = vmul.f32 %v69, %v149
    %v151 = vmul.f32 %v74, %v149
    %v152 = vmul.f32 %v79, %v149
    %v153 = vmul.f32 %v84, %v149
    %v154 = vmul.f32 %v89, %v149
    %v155 = vmul.f32 %v94, %v149
    %v156 = vmul.f32 %v99, %v149
    %v157 = vmul.f32 %v104, %v149
    %v158 = vmul.f32 %v109, %v149
    %v159 = vmul.f32 %v114, %v149
    %v160 = vmul.f32 %v119, %v149
    %v161 = vmul.f32 %v124, %v149
    %v162 = vmul.f32 %v129, %v149
    %v163 = vmul.f32 %v134, %v149
    %v164 = vmul.f32 %v139, %v149
    %v165 = vmul.f32 %v144, %v149
    %167 = vset.pattern.permute.xlu0 0
    %168 = vperm.xlu0 %167, %v34
    %v169 = vpop.permute.xlu0 %168
    %172 = vset.pattern.permute.xlu0 0
    %173 = vperm.xlu0 %172, %v35
    %v174 = vpop.permute.xlu0 %173
    %177 = vset.pattern.permute.xlu0 0
    %178 = vperm.xlu0 %177, %v36
    %v179 = vpop.permute.xlu0 %178
    %182 = vset.pattern.permute.xlu0 0
    %183 = vperm.xlu0 %182, %v37
    %v184 = vpop.permute.xlu0 %183
    %187 = vset.pattern.permute.xlu0 0
    %188 = vperm.xlu0 %187, %v38
    %v189 = vpop.permute.xlu0 %188
    %192 = vset.pattern.permute.xlu0 0
    %193 = vperm.xlu0 %192, %v39
    %v194 = vpop.permute.xlu0 %193
    %197 = vset.pattern.permute.xlu0 0
    %198 = vperm.xlu0 %197, %v40
    %v199 = vpop.permute.xlu0 %198
    %202 = vset.pattern.permute.xlu0 0
    %203 = vperm.xlu0 %202, %v41
    %v204 = vpop.permute.xlu0 %203
    %207 = vset.pattern.permute.xlu0 0
    %208 = vperm.xlu0 %207, %v42
    %v209 = vpop.permute.xlu0 %208
    %212 = vset.pattern.permute.xlu0 0
    %213 = vperm.xlu0 %212, %v43
    %v214 = vpop.permute.xlu0 %213
    %217 = vset.pattern.permute.xlu0 0
    %218 = vperm.xlu0 %217, %v44
    %v219 = vpop.permute.xlu0 %218
    %222 = vset.pattern.permute.xlu0 0
    %223 = vperm.xlu0 %222, %v45
    %v224 = vpop.permute.xlu0 %223
    %227 = vset.pattern.permute.xlu0 0
    %228 = vperm.xlu0 %227, %v46
    %v229 = vpop.permute.xlu0 %228
    %232 = vset.pattern.permute.xlu0 0
    %233 = vperm.xlu0 %232, %v47
    %v234 = vpop.permute.xlu0 %233
    %237 = vset.pattern.permute.xlu0 0
    %238 = vperm.xlu0 %237, %v48
    %v239 = vpop.permute.xlu0 %238
    %242 = vset.pattern.permute.xlu0 0
    %243 = vperm.xlu0 %242, %v49
    %v244 = vpop.permute.xlu0 %243
    %v246 = vadd.f32 %v169, %v150
    %v247 = vadd.f32 %v174, %v151
    %v248 = vadd.f32 %v179, %v152
    %v249 = vadd.f32 %v184, %v153
    %v250 = vadd.f32 %v189, %v154
    %v251 = vadd.f32 %v194, %v155
    %v252 = vadd.f32 %v199, %v156
    %v253 = vadd.f32 %v204, %v157
    %v254 = vadd.f32 %v209, %v158
    %v255 = vadd.f32 %v214, %v159
    %v256 = vadd.f32 %v219, %v160
    %v257 = vadd.f32 %v224, %v161
    %v258 = vadd.f32 %v229, %v162
    %v259 = vadd.f32 %v234, %v163
    %v260 = vadd.f32 %v239, %v164
    %v261 = vadd.f32 %v244, %v165
    %262 = vset.pattern.permute.xlu0 1
    %263 = vperm.xlu0 %262, %v50
    %v264 = vpop.permute.xlu0 %263
    %266 = vset.pattern.permute.xlu0 1
    %267 = vperm.xlu0 %266, %v51
    %v268 = vpop.permute.xlu0 %267
    %270 = vset.pattern.permute.xlu0 1
    %271 = vperm.xlu0 %270, %v52
    %v272 = vpop.permute.xlu0 %271
    %274 = vset.pattern.permute.xlu0 1
    %275 = vperm.xlu0 %274, %v53
    %v276 = vpop.permute.xlu0 %275
    %278 = vset.pattern.permute.xlu0 1
    %279 = vperm.xlu0 %278, %v54
    %v280 = vpop.permute.xlu0 %279
    %282 = vset.pattern.permute.xlu0 1
    %283 = vperm.xlu0 %282, %v55
    %v284 = vpop.permute.xlu0 %283
    %286 = vset.pattern.permute.xlu0 1
    %287 = vperm.xlu0 %286, %v56
    %v288 = vpop.permute.xlu0 %287
    %290 = vset.pattern.permute.xlu0 1
    %291 = vperm.xlu0 %290, %v57
    %v292 = vpop.permute.xlu0 %291
    %294 = vset.pattern.permute.xlu0 1
    %295 = vperm.xlu0 %294, %v58
    %v296 = vpop.permute.xlu0 %295
    %298 = vset.pattern.permute.xlu0 1
    %299 = vperm.xlu0 %298, %v59
    %v300 = vpop.permute.xlu0 %299
    %302 = vset.pattern.permute.xlu0 1
    %303 = vperm.xlu0 %302, %v60
    %v304 = vpop.permute.xlu0 %303
    %306 = vset.pattern.permute.xlu0 1
    %307 = vperm.xlu0 %306, %v61
    %v308 = vpop.permute.xlu0 %307
    %310 = vset.pattern.permute.xlu0 1
    %311 = vperm.xlu0 %310, %v62
    %v312 = vpop.permute.xlu0 %311
    %314 = vset.pattern.permute.xlu0 1
    %315 = vperm.xlu0 %314, %v63
    %v316 = vpop.permute.xlu0 %315
    %318 = vset.pattern.permute.xlu0 1
    %319 = vperm.xlu0 %318, %v64
    %v320 = vpop.permute.xlu0 %319
    %322 = vset.pattern.permute.xlu0 1
    %323 = vperm.xlu0 %322, %v65
    %v324 = vpop.permute.xlu0 %323
    %v326 = vlaneseq
    %v327 = vshrl.u32 %v326, 7
    %v328 = vsub.s32 1, %v327
    %v329 = vrot.slane %v33, %v328
    %v330 = vmul.f32 %v264, %v329
    %v331 = vmul.f32 %v268, %v329
    %v332 = vmul.f32 %v272, %v329
    %v333 = vmul.f32 %v276, %v329
    %v334 = vmul.f32 %v280, %v329
    %v335 = vmul.f32 %v284, %v329
    %v336 = vmul.f32 %v288, %v329
    %v337 = vmul.f32 %v292, %v329
    %v338 = vmul.f32 %v296, %v329
    %v339 = vmul.f32 %v300, %v329
    %v340 = vmul.f32 %v304, %v329
    %v341 = vmul.f32 %v308, %v329
    %v342 = vmul.f32 %v312, %v329
    %v343 = vmul.f32 %v316, %v329
    %v344 = vmul.f32 %v320, %v329
    %v345 = vmul.f32 %v324, %v329
    %v346 = vadd.f32 %v246, %v330
    %v347 = vadd.f32 %v247, %v331
    %v348 = vadd.f32 %v248, %v332
    %v349 = vadd.f32 %v249, %v333
    %v350 = vadd.f32 %v250, %v334
    %v351 = vadd.f32 %v251, %v335
    %v352 = vadd.f32 %v252, %v336
    %v353 = vadd.f32 %v253, %v337
    %v354 = vadd.f32 %v254, %v338
    %v355 = vadd.f32 %v255, %v339
    %v356 = vadd.f32 %v256, %v340
    %v357 = vadd.f32 %v257, %v341
    %v358 = vadd.f32 %v258, %v342
    %v359 = vadd.f32 %v259, %v343
    %v360 = vadd.f32 %v260, %v344
    %v361 = vadd.f32 %v261, %v345
    %v362 = vmul.f32 %v346, 0.01
    %v363 = vmul.f32 %v347, 0.01
    %v364 = vmul.f32 %v348, 0.01
    %v365 = vmul.f32 %v349, 0.01
    %v366 = vmul.f32 %v350, 0.01
    %v367 = vmul.f32 %v351, 0.01
    %v368 = vmul.f32 %v352, 0.01
    %v369 = vmul.f32 %v353, 0.01
    %v370 = vmul.f32 %v354, 0.01
    %v371 = vmul.f32 %v355, 0.01
    %v372 = vmul.f32 %v356, 0.01
    %v373 = vmul.f32 %v357, 0.01
    %v374 = vmul.f32 %v358, 0.01
    %v375 = vmul.f32 %v359, 0.01
    %v376 = vmul.f32 %v360, 0.01
    %v377 = vmul.f32 %v361, 0.01
    %v378 = vmax.f32 %v346, %v362
    %v379 = vmax.f32 %v347, %v363
    %v380 = vmax.f32 %v348, %v364
    %v381 = vmax.f32 %v349, %v365
    %v382 = vmax.f32 %v350, %v366
    %v383 = vmax.f32 %v351, %v367
    %v384 = vmax.f32 %v352, %v368
    %v385 = vmax.f32 %v353, %v369
    %v386 = vmax.f32 %v354, %v370
    %v387 = vmax.f32 %v355, %v371
    %v388 = vmax.f32 %v356, %v372
    %v389 = vmax.f32 %v357, %v373
    %v390 = vmax.f32 %v358, %v374
    %v391 = vmax.f32 %v359, %v375
    %v392 = vmax.f32 %v360, %v376
    %v393 = vmax.f32 %v361, %v377
    %v394 = vld [vmem:[%s3] sm:$0xff]
    %v395 = vld [vmem:[%s3 + $0x8] sm:$0xff]
    %v396 = vld [vmem:[%s3 + $0x10] sm:$0xff]
    %v397 = vld [vmem:[%s3 + $0x18] sm:$0xff]
    %v398 = vld [vmem:[%s3 + $0x20] sm:$0xff]
    %v399 = vld [vmem:[%s3 + $0x28] sm:$0xff]
    %v400 = vld [vmem:[%s3 + $0x30] sm:$0xff]
    %v401 = vld [vmem:[%s3 + $0x38] sm:$0xff]
    %v402 = vld [vmem:[%s3 + $0x40] sm:$0xff]
    %v403 = vld [vmem:[%s3 + $0x48] sm:$0xff]
    %v404 = vld [vmem:[%s3 + $0x50] sm:$0xff]
    %v405 = vld [vmem:[%s3 + $0x58] sm:$0xff]
    %v406 = vld [vmem:[%s3 + $0x60] sm:$0xff]
    %v407 = vld [vmem:[%s3 + $0x68] sm:$0xff]
    %v408 = vld [vmem:[%s3 + $0x70] sm:$0xff]
    %v409 = vld [vmem:[%s3 + $0x78] sm:$0xff]
    %v410 = vld [vmem:[%s4] sm:$0xff]
    %v411 = vld [vmem:[%s4 + $0x8] sm:$0xff]
    %v412 = vld [vmem:[%s4 + $0x10] sm:$0xff]
    %v413 = vld [vmem:[%s4 + $0x18] sm:$0xff]
    %v414 = vld [vmem:[%s4 + $0x20] sm:$0xff]
    %v415 = vld [vmem:[%s4 + $0x28] sm:$0xff]
    %v416 = vld [vmem:[%s4 + $0x30] sm:$0xff]
    %v417 = vld [vmem:[%s4 + $0x38] sm:$0xff]
    %v418 = vld [vmem:[%s4 + $0x40] sm:$0xff]
    %v419 = vld [vmem:[%s4 + $0x48] sm:$0xff]
    %v420 = vld [vmem:[%s4 + $0x50] sm:$0xff]
    %v421 = vld [vmem:[%s4 + $0x58] sm:$0xff]
    %v422 = vld [vmem:[%s4 + $0x60] sm:$0xff]
    %v423 = vld [vmem:[%s4 + $0x68] sm:$0xff]
    %v424 = vld [vmem:[%s4 + $0x70] sm:$0xff]
    %v425 = vld [vmem:[%s4 + $0x78] sm:$0xff]
    %427 = vset.pattern.permute.xlu0 0
    %428 = vperm.xlu0 %427, %v410
    %v429 = vpop.permute.xlu0 %428
    %432 = vset.pattern.permute.xlu0 0
    %433 = vperm.xlu0 %432, %v411
    %v434 = vpop.permute.xlu0 %433
    %437 = vset.pattern.permute.xlu0 0
    %438 = vperm.xlu0 %437, %v412
    %v439 = vpop.permute.xlu0 %438
    %442 = vset.pattern.permute.xlu0 0
    %443 = vperm.xlu0 %442, %v413
    %v444 = vpop.permute.xlu0 %443
    %447 = vset.pattern.permute.xlu0 0
    %448 = vperm.xlu0 %447, %v414
    %v449 = vpop.permute.xlu0 %448
    %452 = vset.pattern.permute.xlu0 0
    %453 = vperm.xlu0 %452, %v415
    %v454 = vpop.permute.xlu0 %453
    %457 = vset.pattern.permute.xlu0 0
    %458 = vperm.xlu0 %457, %v416
    %v459 = vpop.permute.xlu0 %458
    %462 = vset.pattern.permute.xlu0 0
    %463 = vperm.xlu0 %462, %v417
    %v464 = vpop.permute.xlu0 %463
    %467 = vset.pattern.permute.xlu0 0
    %468 = vperm.xlu0 %467, %v418
    %v469 = vpop.permute.xlu0 %468
    %472 = vset.pattern.permute.xlu0 0
    %473 = vperm.xlu0 %472, %v419
    %v474 = vpop.permute.xlu0 %473
    %477 = vset.pattern.permute.xlu0 0
    %478 = vperm.xlu0 %477, %v420
    %v479 = vpop.permute.xlu0 %478
    %482 = vset.pattern.permute.xlu0 0
    %483 = vperm.xlu0 %482, %v421
    %v484 = vpop.permute.xlu0 %483
    %487 = vset.pattern.permute.xlu0 0
    %488 = vperm.xlu0 %487, %v422
    %v489 = vpop.permute.xlu0 %488
    %492 = vset.pattern.permute.xlu0 0
    %493 = vperm.xlu0 %492, %v423
    %v494 = vpop.permute.xlu0 %493
    %497 = vset.pattern.permute.xlu0 0
    %498 = vperm.xlu0 %497, %v424
    %v499 = vpop.permute.xlu0 %498
    %502 = vset.pattern.permute.xlu0 0
    %503 = vperm.xlu0 %502, %v425
    %v504 = vpop.permute.xlu0 %503
    %506 = vmatprep.subr.mxu0 0.0
    %507 = vmatpush1.msra.mxu0 %v393
    %508 = vmatprep.subr.mxu0 0.0
    %509 = vmatpush1.msra.mxu0 %v392
    %510 = vmatprep.subr.mxu0 0.0
    %511 = vmatpush1.msra.mxu0 %v391
    %512 = vmatprep.subr.mxu0 0.0
    %513 = vmatpush1.msra.mxu0 %v390
    %514 = vmatprep.subr.mxu0 0.0
    %515 = vmatpush1.msra.mxu0 %v389
    %516 = vmatprep.subr.mxu0 0.0
    %517 = vmatpush1.msra.mxu0 %v388
    %518 = vmatprep.subr.mxu0 0.0
    %519 = vmatpush1.msra.mxu0 %v387
    %520 = vmatprep.subr.mxu0 0.0
    %521 = vmatpush1.msra.mxu0 %v386
    %522 = vmatprep.subr.mxu0 0.0
    %523 = vmatpush1.msra.mxu0 %v385
    %524 = vmatprep.subr.mxu0 0.0
    %525 = vmatpush1.msra.mxu0 %v384
    %526 = vmatprep.subr.mxu0 0.0
    %527 = vmatpush1.msra.mxu0 %v383
    %528 = vmatprep.subr.mxu0 0.0
    %529 = vmatpush1.msra.mxu0 %v382
    %530 = vmatprep.subr.mxu0 0.0
    %531 = vmatpush1.msra.mxu0 %v381
    %532 = vmatprep.subr.mxu0 0.0
    %533 = vmatpush1.msra.mxu0 %v380
    %534 = vmatprep.subr.mxu0 0.0
    %535 = vmatpush1.msra.mxu0 %v379
    %536 = vmatprep.subr.mxu0 0.0
    %537 = vmatpush1.msra.mxu0 %v378
    %538 = vmatprep.subr.mxu0 0.0
    %539 = vmatpush2.msra.mxu0 0.0
    %540 = vmatprep.subr.mxu0 0.0
    %541 = vmatpush2.msra.mxu0 0.0
    %542 = vmatprep.subr.mxu0 0.0
    %543 = vmatpush2.msra.mxu0 0.0
    %544 = vmatprep.subr.mxu0 0.0
    %545 = vmatpush2.msra.mxu0 0.0
    %546 = vmatprep.subr.mxu0 0.0
    %547 = vmatpush2.msra.mxu0 0.0
    %548 = vmatprep.subr.mxu0 0.0
    %549 = vmatpush2.msra.mxu0 0.0
    %550 = vmatprep.subr.mxu0 0.0
    %551 = vmatpush2.msra.mxu0 0.0
    %552 = vmatprep.subr.mxu0 0.0
    %553 = vmatpush2.msra.mxu0 0.0
    %554 = vmatprep.subr.mxu0 0.0
    %555 = vmatpush2.msra.mxu0 0.0
    %556 = vmatprep.subr.mxu0 0.0
    %557 = vmatpush2.msra.mxu0 0.0
    %558 = vmatprep.subr.mxu0 0.0
    %559 = vmatpush2.msra.mxu0 0.0
    %560 = vmatprep.subr.mxu0 0.0
    %561 = vmatpush2.msra.mxu0 0.0
    %562 = vmatprep.subr.mxu0 0.0
    %563 = vmatpush2.msra.mxu0 0.0
    %564 = vmatprep.subr.mxu0 0.0
    %565 = vmatpush2.msra.mxu0 0.0
    %566 = vmatprep.subr.mxu0 0.0
    %567 = vmatpush2.msra.mxu0 0.0
    %568 = vmatprep.subr.mxu0 0.0
    %569 = vmatpush2.msra.mxu0 0.0
    %570 = vmatprep.mubr.f32.mxu0 0.0
    %571 = vmatmul.mubr.f32.gmra.mxu0 %v394
    %v572 = vpop.f32.mrf.mxu0
    %v573 = vadd.f32 %v429, %v572
    %v574 = vpop.f32.mrf.mxu0
    %575 = vmatprep.mubr.f32.mxu0 0.0
    %576 = vmatmul.mubr.f32.gmra.mxu0 %v395
    %v577 = vpop.f32.mrf.mxu0
    %v578 = vadd.f32 %v434, %v577
    %v579 = vpop.f32.mrf.mxu0
    %580 = vmatprep.mubr.f32.mxu0 0.0
    %581 = vmatmul.mubr.f32.gmra.mxu0 %v396
    %v582 = vpop.f32.mrf.mxu0
    %v583 = vadd.f32 %v439, %v582
    %v584 = vpop.f32.mrf.mxu0
    %585 = vmatprep.mubr.f32.mxu0 0.0
    %586 = vmatmul.mubr.f32.gmra.mxu0 %v397
    %v587 = vpop.f32.mrf.mxu0
    %v588 = vadd.f32 %v444, %v587
    %v589 = vpop.f32.mrf.mxu0
    %590 = vmatprep.mubr.f32.mxu0 0.0
    %591 = vmatmul.mubr.f32.gmra.mxu0 %v398
    %v592 = vpop.f32.mrf.mxu0
    %v593 = vadd.f32 %v449, %v592
    %v594 = vpop.f32.mrf.mxu0
    %595 = vmatprep.mubr.f32.mxu0 0.0
    %596 = vmatmul.mubr.f32.gmra.mxu0 %v399
    %v597 = vpop.f32.mrf.mxu0
    %v598 = vadd.f32 %v454, %v597
    %v599 = vpop.f32.mrf.mxu0
    %600 = vmatprep.mubr.f32.mxu0 0.0
    %601 = vmatmul.mubr.f32.gmra.mxu0 %v400
    %v602 = vpop.f32.mrf.mxu0
    %v603 = vadd.f32 %v459, %v602
    %v604 = vpop.f32.mrf.mxu0
    %605 = vmatprep.mubr.f32.mxu0 0.0
    %606 = vmatmul.mubr.f32.gmra.mxu0 %v401
    %v607 = vpop.f32.mrf.mxu0
    %v608 = vadd.f32 %v464, %v607
    %v609 = vpop.f32.mrf.mxu0
    %610 = vmatprep.mubr.f32.mxu0 0.0
    %611 = vmatmul.mubr.f32.gmra.mxu0 %v402
    %v612 = vpop.f32.mrf.mxu0
    %v613 = vadd.f32 %v469, %v612
    %v614 = vpop.f32.mrf.mxu0
    %615 = vmatprep.mubr.f32.mxu0 0.0
    %616 = vmatmul.mubr.f32.gmra.mxu0 %v403
    %v617 = vpop.f32.mrf.mxu0
    %v618 = vadd.f32 %v474, %v617
    %v619 = vpop.f32.mrf.mxu0
    %620 = vmatprep.mubr.f32.mxu0 0.0
    %621 = vmatmul.mubr.f32.gmra.mxu0 %v404
    %v622 = vpop.f32.mrf.mxu0
    %v623 = vadd.f32 %v479, %v622
    %v624 = vpop.f32.mrf.mxu0
    %625 = vmatprep.mubr.f32.mxu0 0.0
    %626 = vmatmul.mubr.f32.gmra.mxu0 %v405
    %v627 = vpop.f32.mrf.mxu0
    %v628 = vadd.f32 %v484, %v627
    %v629 = vpop.f32.mrf.mxu0
    %630 = vmatprep.mubr.f32.mxu0 0.0
    %631 = vmatmul.mubr.f32.gmra.mxu0 %v406
    %v632 = vpop.f32.mrf.mxu0
    %v633 = vadd.f32 %v489, %v632
    %v634 = vpop.f32.mrf.mxu0
    %635 = vmatprep.mubr.f32.mxu0 0.0
    %636 = vmatmul.mubr.f32.gmra.mxu0 %v407
    %v637 = vpop.f32.mrf.mxu0
    %v638 = vadd.f32 %v494, %v637
    %v639 = vpop.f32.mrf.mxu0
    %640 = vmatprep.mubr.f32.mxu0 0.0
    %641 = vmatmul.mubr.f32.gmra.mxu0 %v408
    %v642 = vpop.f32.mrf.mxu0
    %v643 = vadd.f32 %v499, %v642
    %v644 = vpop.f32.mrf.mxu0
    %645 = vmatprep.mubr.f32.mxu0 0.0
    %646 = vmatmul.mubr.f32.gmra.mxu0 %v409
    %v647 = vpop.f32.mrf.mxu0
    %v648 = vadd.f32 %v504, %v647
    %v649 = vpop.f32.mrf.mxu0
    %650 = vdwg.mxu0
    %v651 = vmul.f32 %v573, 0.01
    %v652 = vmul.f32 %v578, 0.01
    %v653 = vmul.f32 %v583, 0.01
    %v654 = vmul.f32 %v588, 0.01
    %v655 = vmul.f32 %v593, 0.01
    %v656 = vmul.f32 %v598, 0.01
    %v657 = vmul.f32 %v603, 0.01
    %v658 = vmul.f32 %v608, 0.01
    %v659 = vmul.f32 %v613, 0.01
    %v660 = vmul.f32 %v618, 0.01
    %v661 = vmul.f32 %v623, 0.01
    %v662 = vmul.f32 %v628, 0.01
    %v663 = vmul.f32 %v633, 0.01
    %v664 = vmul.f32 %v638, 0.01
    %v665 = vmul.f32 %v643, 0.01
    %v666 = vmul.f32 %v648, 0.01
    %v667 = vmax.f32 %v573, %v651
    %v668 = vmax.f32 %v578, %v652
    %v669 = vmax.f32 %v583, %v653
    %v670 = vmax.f32 %v588, %v654
    %v671 = vmax.f32 %v593, %v655
    %v672 = vmax.f32 %v598, %v656
    %v673 = vmax.f32 %v603, %v657
    %v674 = vmax.f32 %v608, %v658
    %v675 = vmax.f32 %v613, %v659
    %v676 = vmax.f32 %v618, %v660
    %v677 = vmax.f32 %v623, %v661
    %v678 = vmax.f32 %v628, %v662
    %v679 = vmax.f32 %v633, %v663
    %v680 = vmax.f32 %v638, %v664
    %v681 = vmax.f32 %v643, %v665
    %v682 = vmax.f32 %v648, %v666
    %v683 = vld [vmem:[%s5] sm:$0xff]
    %v684 = vld [vmem:[%s5 + $0x8] sm:$0xff]
    %v685 = vld [vmem:[%s5 + $0x10] sm:$0xff]
    %v686 = vld [vmem:[%s5 + $0x18] sm:$0xff]
    %v687 = vld [vmem:[%s5 + $0x20] sm:$0xff]
    %v688 = vld [vmem:[%s5 + $0x28] sm:$0xff]
    %v689 = vld [vmem:[%s5 + $0x30] sm:$0xff]
    %v690 = vld [vmem:[%s5 + $0x38] sm:$0xff]
    %v691 = vld [vmem:[%s5 + $0x40] sm:$0xff]
    %v692 = vld [vmem:[%s5 + $0x48] sm:$0xff]
    %v693 = vld [vmem:[%s5 + $0x50] sm:$0xff]
    %v694 = vld [vmem:[%s5 + $0x58] sm:$0xff]
    %v695 = vld [vmem:[%s5 + $0x60] sm:$0xff]
    %v696 = vld [vmem:[%s5 + $0x68] sm:$0xff]
    %v697 = vld [vmem:[%s5 + $0x70] sm:$0xff]
    %v698 = vld [vmem:[%s5 + $0x78] sm:$0xff]
    %v699 = vld [vmem:[%s6] sm:$0xff]
    %v700 = vld [vmem:[%s6 + $0x8] sm:$0xff]
    %v701 = vld [vmem:[%s6 + $0x10] sm:$0xff]
    %v702 = vld [vmem:[%s6 + $0x18] sm:$0xff]
    %v703 = vld [vmem:[%s6 + $0x20] sm:$0xff]
    %v704 = vld [vmem:[%s6 + $0x28] sm:$0xff]
    %v705 = vld [vmem:[%s6 + $0x30] sm:$0xff]
    %v706 = vld [vmem:[%s6 + $0x38] sm:$0xff]
    %v707 = vld [vmem:[%s6 + $0x40] sm:$0xff]
    %v708 = vld [vmem:[%s6 + $0x48] sm:$0xff]
    %v709 = vld [vmem:[%s6 + $0x50] sm:$0xff]
    %v710 = vld [vmem:[%s6 + $0x58] sm:$0xff]
    %v711 = vld [vmem:[%s6 + $0x60] sm:$0xff]
    %v712 = vld [vmem:[%s6 + $0x68] sm:$0xff]
    %v713 = vld [vmem:[%s6 + $0x70] sm:$0xff]
    %v714 = vld [vmem:[%s6 + $0x78] sm:$0xff]
    %716 = vset.pattern.permute.xlu0 0
    %717 = vperm.xlu0 %716, %v699
    %v718 = vpop.permute.xlu0 %717
    %721 = vset.pattern.permute.xlu0 0
    %722 = vperm.xlu0 %721, %v700
    %v723 = vpop.permute.xlu0 %722
    %726 = vset.pattern.permute.xlu0 0
    %727 = vperm.xlu0 %726, %v701
    %v728 = vpop.permute.xlu0 %727
    %731 = vset.pattern.permute.xlu0 0
    %732 = vperm.xlu0 %731, %v702
    %v733 = vpop.permute.xlu0 %732
    %736 = vset.pattern.permute.xlu0 0
    %737 = vperm.xlu0 %736, %v703
    %v738 = vpop.permute.xlu0 %737
    %741 = vset.pattern.permute.xlu0 0
    %742 = vperm.xlu0 %741, %v704
    %v743 = vpop.permute.xlu0 %742
    %746 = vset.pattern.permute.xlu0 0
    %747 = vperm.xlu0 %746, %v705
    %v748 = vpop.permute.xlu0 %747
    %751 = vset.pattern.permute.xlu0 0
    %752 = vperm.xlu0 %751, %v706
    %v753 = vpop.permute.xlu0 %752
    %756 = vset.pattern.permute.xlu0 0
    %757 = vperm.xlu0 %756, %v707
    %v758 = vpop.permute.xlu0 %757
    %761 = vset.pattern.permute.xlu0 0
    %762 = vperm.xlu0 %761, %v708
    %v763 = vpop.permute.xlu0 %762
    %766 = vset.pattern.permute.xlu0 0
    %767 = vperm.xlu0 %766, %v709
    %v768 = vpop.permute.xlu0 %767
    %771 = vset.pattern.permute.xlu0 0
    %772 = vperm.xlu0 %771, %v710
    %v773 = vpop.permute.xlu0 %772
    %776 = vset.pattern.permute.xlu0 0
    %777 = vperm.xlu0 %776, %v711
    %v778 = vpop.permute.xlu0 %777
    %781 = vset.pattern.permute.xlu0 0
    %782 = vperm.xlu0 %781, %v712
    %v783 = vpop.permute.xlu0 %782
    %786 = vset.pattern.permute.xlu0 0
    %787 = vperm.xlu0 %786, %v713
    %v788 = vpop.permute.xlu0 %787
    %791 = vset.pattern.permute.xlu0 0
    %792 = vperm.xlu0 %791, %v714
    %v793 = vpop.permute.xlu0 %792
    %795 = vmatprep.subr.mxu0 0.0
    %796 = vmatpush1.msra.mxu0 %v682
    %797 = vmatprep.subr.mxu0 0.0
    %798 = vmatpush1.msra.mxu0 %v681
    %799 = vmatprep.subr.mxu0 0.0
    %800 = vmatpush1.msra.mxu0 %v680
    %801 = vmatprep.subr.mxu0 0.0
    %802 = vmatpush1.msra.mxu0 %v679
    %803 = vmatprep.subr.mxu0 0.0
    %804 = vmatpush1.msra.mxu0 %v678
    %805 = vmatprep.subr.mxu0 0.0
    %806 = vmatpush1.msra.mxu0 %v677
    %807 = vmatprep.subr.mxu0 0.0
    %808 = vmatpush1.msra.mxu0 %v676
    %809 = vmatprep.subr.mxu0 0.0
    %810 = vmatpush1.msra.mxu0 %v675
    %811 = vmatprep.subr.mxu0 0.0
    %812 = vmatpush1.msra.mxu0 %v674
    %813 = vmatprep.subr.mxu0 0.0
    %814 = vmatpush1.msra.mxu0 %v673
    %815 = vmatprep.subr.mxu0 0.0
    %816 = vmatpush1.msra.mxu0 %v672
    %817 = vmatprep.subr.mxu0 0.0
    %818 = vmatpush1.msra.mxu0 %v671
    %819 = vmatprep.subr.mxu0 0.0
    %820 = vmatpush1.msra.mxu0 %v670
    %821 = vmatprep.subr.mxu0 0.0
    %822 = vmatpush1.msra.mxu0 %v669
    %823 = vmatprep.subr.mxu0 0.0
    %824 = vmatpush1.msra.mxu0 %v668
    %825 = vmatprep.subr.mxu0 0.0
    %826 = vmatpush1.msra.mxu0 %v667
    %827 = vmatprep.subr.mxu0 0.0
    %828 = vmatpush2.msra.mxu0 0.0
    %829 = vmatprep.subr.mxu0 0.0
    %830 = vmatpush2.msra.mxu0 0.0
    %831 = vmatprep.subr.mxu0 0.0
    %832 = vmatpush2.msra.mxu0 0.0
    %833 = vmatprep.subr.mxu0 0.0
    %834 = vmatpush2.msra.mxu0 0.0
    %835 = vmatprep.subr.mxu0 0.0
    %836 = vmatpush2.msra.mxu0 0.0
    %837 = vmatprep.subr.mxu0 0.0
    %838 = vmatpush2.msra.mxu0 0.0
    %839 = vmatprep.subr.mxu0 0.0
    %840 = vmatpush2.msra.mxu0 0.0
    %841 = vmatprep.subr.mxu0 0.0
    %842 = vmatpush2.msra.mxu0 0.0
    %843 = vmatprep.subr.mxu0 0.0
    %844 = vmatpush2.msra.mxu0 0.0
    %845 = vmatprep.subr.mxu0 0.0
    %846 = vmatpush2.msra.mxu0 0.0
    %847 = vmatprep.subr.mxu0 0.0
    %848 = vmatpush2.msra.mxu0 0.0
    %849 = vmatprep.subr.mxu0 0.0
    %850 = vmatpush2.msra.mxu0 0.0
    %851 = vmatprep.subr.mxu0 0.0
    %852 = vmatpush2.msra.mxu0 0.0
    %853 = vmatprep.subr.mxu0 0.0
    %854 = vmatpush2.msra.mxu0 0.0
    %855 = vmatprep.subr.mxu0 0.0
    %856 = vmatpush2.msra.mxu0 0.0
    %857 = vmatprep.subr.mxu0 0.0
    %858 = vmatpush2.msra.mxu0 0.0
    %859 = vmatprep.mubr.f32.mxu0 0.0
    %860 = vmatmul.mubr.f32.gmra.mxu0 %v683
    %v861 = vpop.f32.mrf.mxu0
    %v862 = vadd.f32 %v718, %v861
    %v863 = vpop.f32.mrf.mxu0
    %864 = vmatprep.mubr.f32.mxu0 0.0
    %865 = vmatmul.mubr.f32.gmra.mxu0 %v684
    %v866 = vpop.f32.mrf.mxu0
    %v867 = vadd.f32 %v723, %v866
    %v868 = vpop.f32.mrf.mxu0
    %869 = vmatprep.mubr.f32.mxu0 0.0
    %870 = vmatmul.mubr.f32.gmra.mxu0 %v685
    %v871 = vpop.f32.mrf.mxu0
    %v872 = vadd.f32 %v728, %v871
    %v873 = vpop.f32.mrf.mxu0
    %874 = vmatprep.mubr.f32.mxu0 0.0
    %875 = vmatmul.mubr.f32.gmra.mxu0 %v686
    %v876 = vpop.f32.mrf.mxu0
    %v877 = vadd.f32 %v733, %v876
    %v878 = vpop.f32.mrf.mxu0
    %879 = vmatprep.mubr.f32.mxu0 0.0
    %880 = vmatmul.mubr.f32.gmra.mxu0 %v687
    %v881 = vpop.f32.mrf.mxu0
    %v882 = vadd.f32 %v738, %v881
    %v883 = vpop.f32.mrf.mxu0
    %884 = vmatprep.mubr.f32.mxu0 0.0
    %885 = vmatmul.mubr.f32.gmra.mxu0 %v688
    %v886 = vpop.f32.mrf.mxu0
    %v887 = vadd.f32 %v743, %v886
    %v888 = vpop.f32.mrf.mxu0
    %889 = vmatprep.mubr.f32.mxu0 0.0
    %890 = vmatmul.mubr.f32.gmra.mxu0 %v689
    %v891 = vpop.f32.mrf.mxu0
    %v892 = vadd.f32 %v748, %v891
    %v893 = vpop.f32.mrf.mxu0
    %894 = vmatprep.mubr.f32.mxu0 0.0
    %895 = vmatmul.mubr.f32.gmra.mxu0 %v690
    %v896 = vpop.f32.mrf.mxu0
    %v897 = vadd.f32 %v753, %v896
    %v898 = vpop.f32.mrf.mxu0
    %899 = vmatprep.mubr.f32.mxu0 0.0
    %900 = vmatmul.mubr.f32.gmra.mxu0 %v691
    %v901 = vpop.f32.mrf.mxu0
    %v902 = vadd.f32 %v758, %v901
    %v903 = vpop.f32.mrf.mxu0
    %904 = vmatprep.mubr.f32.mxu0 0.0
    %905 = vmatmul.mubr.f32.gmra.mxu0 %v692
    %v906 = vpop.f32.mrf.mxu0
    %v907 = vadd.f32 %v763, %v906
    %v908 = vpop.f32.mrf.mxu0
    %909 = vmatprep.mubr.f32.mxu0 0.0
    %910 = vmatmul.mubr.f32.gmra.mxu0 %v693
    %v911 = vpop.f32.mrf.mxu0
    %v912 = vadd.f32 %v768, %v911
    %v913 = vpop.f32.mrf.mxu0
    %914 = vmatprep.mubr.f32.mxu0 0.0
    %915 = vmatmul.mubr.f32.gmra.mxu0 %v694
    %v916 = vpop.f32.mrf.mxu0
    %v917 = vadd.f32 %v773, %v916
    %v918 = vpop.f32.mrf.mxu0
    %919 = vmatprep.mubr.f32.mxu0 0.0
    %920 = vmatmul.mubr.f32.gmra.mxu0 %v695
    %v921 = vpop.f32.mrf.mxu0
    %v922 = vadd.f32 %v778, %v921
    %v923 = vpop.f32.mrf.mxu0
    %924 = vmatprep.mubr.f32.mxu0 0.0
    %925 = vmatmul.mubr.f32.gmra.mxu0 %v696
    %v926 = vpop.f32.mrf.mxu0
    %v927 = vadd.f32 %v783, %v926
    %v928 = vpop.f32.mrf.mxu0
    %929 = vmatprep.mubr.f32.mxu0 0.0
    %930 = vmatmul.mubr.f32.gmra.mxu0 %v697
    %v931 = vpop.f32.mrf.mxu0
    %v932 = vadd.f32 %v788, %v931
    %v933 = vpop.f32.mrf.mxu0
    %934 = vmatprep.mubr.f32.mxu0 0.0
    %935 = vmatmul.mubr.f32.gmra.mxu0 %v698
    %v936 = vpop.f32.mrf.mxu0
    %v937 = vadd.f32 %v793, %v936
    %v938 = vpop.f32.mrf.mxu0
    %939 = vdwg.mxu0
    %v940 = vmul.f32 %v862, 0.01
    %v941 = vmul.f32 %v867, 0.01
    %v942 = vmul.f32 %v872, 0.01
    %v943 = vmul.f32 %v877, 0.01
    %v944 = vmul.f32 %v882, 0.01
    %v945 = vmul.f32 %v887, 0.01
    %v946 = vmul.f32 %v892, 0.01
    %v947 = vmul.f32 %v897, 0.01
    %v948 = vmul.f32 %v902, 0.01
    %v949 = vmul.f32 %v907, 0.01
    %v950 = vmul.f32 %v912, 0.01
    %v951 = vmul.f32 %v917, 0.01
    %v952 = vmul.f32 %v922, 0.01
    %v953 = vmul.f32 %v927, 0.01
    %v954 = vmul.f32 %v932, 0.01
    %v955 = vmul.f32 %v937, 0.01
    %v956 = vmax.f32 %v862, %v940
    %v957 = vmax.f32 %v867, %v941
    %v958 = vmax.f32 %v872, %v942
    %v959 = vmax.f32 %v877, %v943
    %v960 = vmax.f32 %v882, %v944
    %v961 = vmax.f32 %v887, %v945
    %v962 = vmax.f32 %v892, %v946
    %v963 = vmax.f32 %v897, %v947
    %v964 = vmax.f32 %v902, %v948
    %v965 = vmax.f32 %v907, %v949
    %v966 = vmax.f32 %v912, %v950
    %v967 = vmax.f32 %v917, %v951
    %v968 = vmax.f32 %v922, %v952
    %v969 = vmax.f32 %v927, %v953
    %v970 = vmax.f32 %v932, %v954
    %v971 = vmax.f32 %v937, %v955
    %v972 = vld [vmem:[%s7] sm:$0x3]
    %v973 = vld [vmem:[%s8] sm:$0x3]
    %975 = vset.pattern.permute.xlu0 0
    %976 = vperm.xlu0 %975, %v973
    %v977 = vpop.permute.xlu0 %976
    %979 = vmatprep.subr.mxu0 0.0
    %980 = vmatpush1.msra.mxu0 %v971
    %981 = vmatprep.subr.mxu0 0.0
    %982 = vmatpush1.msra.mxu0 %v970
    %983 = vmatprep.subr.mxu0 0.0
    %984 = vmatpush1.msra.mxu0 %v969
    %985 = vmatprep.subr.mxu0 0.0
    %986 = vmatpush1.msra.mxu0 %v968
    %987 = vmatprep.subr.mxu0 0.0
    %988 = vmatpush1.msra.mxu0 %v967
    %989 = vmatprep.subr.mxu0 0.0
    %990 = vmatpush1.msra.mxu0 %v966
    %991 = vmatprep.subr.mxu0 0.0
    %992 = vmatpush1.msra.mxu0 %v965
    %993 = vmatprep.subr.mxu0 0.0
    %994 = vmatpush1.msra.mxu0 %v964
    %995 = vmatprep.subr.mxu0 0.0
    %996 = vmatpush1.msra.mxu0 %v963
    %997 = vmatprep.subr.mxu0 0.0
    %998 = vmatpush1.msra.mxu0 %v962
    %999 = vmatprep.subr.mxu0 0.0
    %1000 = vmatpush1.msra.mxu0 %v961
    %1001 = vmatprep.subr.mxu0 0.0
    %1002 = vmatpush1.msra.mxu0 %v960
    %1003 = vmatprep.subr.mxu0 0.0
    %1004 = vmatpush1.msra.mxu0 %v959
    %1005 = vmatprep.subr.mxu0 0.0
    %1006 = vmatpush1.msra.mxu0 %v958
    %1007 = vmatprep.subr.mxu0 0.0
    %1008 = vmatpush1.msra.mxu0 %v957
    %1009 = vmatprep.subr.mxu0 0.0
    %1010 = vmatpush1.msra.mxu0 %v956
    %1011 = vmatprep.subr.mxu0 0.0
    %1012 = vmatpush2.msra.mxu0 0.0
    %1013 = vmatprep.subr.mxu0 0.0
    %1014 = vmatpush2.msra.mxu0 0.0
    %1015 = vmatprep.subr.mxu0 0.0
    %1016 = vmatpush2.msra.mxu0 0.0
    %1017 = vmatprep.subr.mxu0 0.0
    %1018 = vmatpush2.msra.mxu0 0.0
    %1019 = vmatprep.subr.mxu0 0.0
    %1020 = vmatpush2.msra.mxu0 0.0
    %1021 = vmatprep.subr.mxu0 0.0
    %1022 = vmatpush2.msra.mxu0 0.0
    %1023 = vmatprep.subr.mxu0 0.0
    %1024 = vmatpush2.msra.mxu0 0.0
    %1025 = vmatprep.subr.mxu0 0.0
    %1026 = vmatpush2.msra.mxu0 0.0
    %1027 = vmatprep.subr.mxu0 0.0
    %1028 = vmatpush2.msra.mxu0 0.0
    %1029 = vmatprep.subr.mxu0 0.0
    %1030 = vmatpush2.msra.mxu0 0.0
    %1031 = vmatprep.subr.mxu0 0.0
    %1032 = vmatpush2.msra.mxu0 0.0
    %1033 = vmatprep.subr.mxu0 0.0
    %1034 = vmatpush2.msra.mxu0 0.0
    %1035 = vmatprep.subr.mxu0 0.0
    %1036 = vmatpush2.msra.mxu0 0.0
    %1037 = vmatprep.subr.mxu0 0.0
    %1038 = vmatpush2.msra.mxu0 0.0
    %1039 = vmatprep.subr.mxu0 0.0
    %1040 = vmatpush2.msra.mxu0 0.0
    %1041 = vmatprep.subr.mxu0 0.0
    %1042 = vmatpush2.msra.mxu0 0.0
    %1043 = vmatprep.mubr.f32.mxu0 0.0
    %1044 = vmatmul.mubr.f32.gmra.mxu0 %v972
    %v1045 = vpop.f32.mrf.mxu0
    %v1046 = vadd.f32 %v977, %v1045
    %v1047 = vpop.f32.mrf.mxu0
    %1048 = vdwg.mxu0
    %1049 = vst [vmem:[#allocation2] sm:$0x3] %v1046
    // Predicated region
    $region38: #{tpu_custom_call.1} parent=1 // pred_check
      _
    $region39: #{tpu_custom_call.1} parent=1 // pred_check_branch
      %1051 = sbr.rel (0) target = $region41
    $region40: #{tpu_custom_call.1} parent=1 // pred_region
      %s1053 = ssub.s32 32, 32
      %1054 = vsyncadd [#allocation3], %s1053
      %s1056 = sshll.u32 [#allocation2], 4
      %s1057 = int_to_ptr.vmem [resolvable:$true] %s1056
      %1059 = dma.vmem_to_hbm [thread:$0]  %s1057, 32, %s9, [#allocation3]
    $region41: #{tpu_custom_call.1} parent=1 // pred_fallthru
      _
    // Predicated region
    $region42: #{tpu_custom_call.1} parent=1 // pred_check
      _
    $region43: #{tpu_custom_call.1} parent=1 // pred_check_branch
      %1061 = sbr.rel (0) target = $region45
    $region44: #{tpu_custom_call.1} parent=1 // pred_region
      %1062 = dma.done [#allocation3], 32
    $region45: #{tpu_custom_call.1} parent=1 // pred_fallthru
      _
    %1063 = vsyncpa [#allocation3], 1

</llo_original>
